<compile_context>
chip_gen: v7x
topology: tpu7x:2x2x1
jax: 0.10.0
libtpu: 0.0.40
codegen_flags: <defaults>
</compile_context>

<pallas_src>
from functools import partial

import jax
import jax.numpy as jnp
from jax.experimental import pallas as pl
from jax.experimental.pallas import tpu as pltpu


def simple_ann_kernel(x_ref, wce_ref, wco_ref, bc_ref, w1_ref, b1_ref, w2_ref, b2_ref, out_ref):
    x = x_ref[...]                                                           # (TB, L*Cin) bf16

    # Conv1d(k=3, padding=1) + bias, split into even/odd output positions so the pool pairs
    # are lane-aligned between the two results (no roll, no zero-padded fc1 rows).
    bc = bc_ref[...]                                                         # (1, L2*Cout) f32
    conv_e = jnp.dot(x, wce_ref[...], preferred_element_type=jnp.float32) + bc
    conv_o = jnp.dot(x, wco_ref[...], preferred_element_type=jnp.float32) + bc

    # ReLU + MaxPool1d(2): max(relu(even), relu(odd)) == relu(max(even, odd)).
    pm = jnp.maximum(jnp.maximum(conv_e, conv_o), 0.0)                       # (TB, L2*Cout) f32

    # fc1 + ReLU (pool compaction + PyTorch channel-major flatten folded into w1's row layout).
    h1 = jnp.dot(pm.astype(w1_ref.dtype), w1_ref[...],
                 preferred_element_type=jnp.float32) + b1_ref[...]
    h1 = jnp.maximum(h1, 0.0)                                                # (TB, H) f32

    # fc2 (output padded to 128 lanes -> unmasked lane-dense store).
    out = jnp.dot(h1.astype(w2_ref.dtype), w2_ref[...],
                  preferred_element_type=jnp.float32) + b2_ref[...]
    out_ref[...] = out.astype(out_ref.dtype)                                 # (TB, 128)


def _pick_tb(batch, tb_max=256, granule=16):
    """Batch rows per grid step: big enough to fill the MXU / amortize step overhead,
    small enough to keep >=2 grid steps (v7x dual TensorCores) when the batch allows."""
    b_ceil = pl.cdiv(batch, granule) * granule
    if b_ceil <= granule:
        return granule
    half = max(granule, (b_ceil // 2) // granule * granule)
    return min(tb_max, half, b_ceil)


def simple_ann_forward(x, w_conv_pt, b_conv, w1_pt, b1, w2_pt, b2, *, tb=None, nc_pad=128):
    """x: (B, seq_len, input_dim); weights in native PyTorch layouts."""
    B, L, Cin = x.shape
    Cout = w_conv_pt.shape[0]          # 64
    H = w1_pt.shape[0]                 # 128
    NC = w2_pt.shape[0]                # num_classes
    L2 = L // 2                        # MaxPool1d(2) drops a trailing odd element, like PyTorch

    f32, bf16 = jnp.float32, jnp.bfloat16

    if tb is None:
        tb = _pick_tb(B)
    assert tb % 16 == 0, "tb must be a multiple of 16 for bf16 input tiles"

    # ---- one-time weight repacks (plain XLA, outside the kernel) ----
    # conv1.weight (Cout, Cin, 3) -> banded (L*Cin, L*Cout):
    #   wc_big[s*Cin + i, t*Cout + o] = W[o, i, s - t + 1] if |s - t| <= 1 else 0
    # Zero padding at sequence ends is implicit in the band.
    wk = jnp.transpose(w_conv_pt, (2, 1, 0)).astype(f32)                 # (3, Cin, Cout)
    s_idx = jnp.arange(L)[:, None]
    t_idx = jnp.arange(L)[None, :]
    band = ((s_idx - t_idx + 1)[None, :, :] == jnp.arange(3)[:, None, None]).astype(f32)
    wc_big = jnp.einsum("kst,kio->sito", band, wk).reshape(L * Cin, L * Cout)
    # Split into even / odd output positions (pool pairs), bf16 for the MXU.
    wc4 = wc_big[:, : 2 * L2 * Cout].reshape(L * Cin, L2, 2, Cout)
    wc_even = wc4[:, :, 0, :].reshape(L * Cin, L2 * Cout).astype(bf16)
    wc_odd = wc4[:, :, 1, :].reshape(L * Cin, L2 * Cout).astype(bf16)
    bc_big = jnp.tile(b_conv.astype(f32), L2).reshape(1, L2 * Cout)      # bc[tp*Cout+o] = b[o]

    # fc1.weight (H, Cout*L2), PyTorch flat index c*L2 + tp  ->  (L2*Cout, H) where row
    # tp*Cout + c carries W1[:, c*L2 + tp] (dense: pool compaction already done by even/odd split).
    w1_packed = jnp.transpose(w1_pt.reshape(H, Cout, L2), (2, 1, 0)).reshape(L2 * Cout, H)
    w1_packed = w1_packed.astype(bf16)
    b1r = b1.astype(f32).reshape(1, H)

    # fc2.weight (NC, H) -> (H, nc_pad) zero-padded to a lane-dense output width.
    w2_pad = jnp.zeros((H, nc_pad), bf16).at[:, :NC].set(jnp.transpose(w2_pt).astype(bf16))
    b2_pad = jnp.zeros((1, nc_pad), f32).at[:, :NC].set(b2.astype(f32).reshape(1, NC))

    # ---- batch-tiled, lane-dense bf16 input ----
    x_flat = x.reshape(B, L * Cin).astype(bf16)                          # x_flat[b, s*Cin + i]
    Bp = pl.cdiv(B, tb) * tb
    if Bp != B:
        x_flat = jnp.pad(x_flat, ((0, Bp - B), (0, 0)))

    resident = partial(pl.BlockSpec, pipeline_mode=pl.Buffered(1))       # fetched once, 1 buffer

    out = pl.pallas_call(
        simple_ann_kernel,
        out_shape=jax.ShapeDtypeStruct((Bp, nc_pad), jnp.float32),
        grid=(Bp // tb,),
        in_specs=[
            pl.BlockSpec((tb, L * Cin), lambda b: (b, 0)),               # x tile (per grid step)
            resident((L * Cin, L2 * Cout), lambda b: (0, 0)),            # conv band (even positions)
            resident((L * Cin, L2 * Cout), lambda b: (0, 0)),            # conv band (odd positions)
            resident((1, L2 * Cout), lambda b: (0, 0)),                  # conv bias
            resident((L2 * Cout, H), lambda b: (0, 0)),                  # fc1 weight (dense K)
            resident((1, H), lambda b: (0, 0)),                          # fc1 bias
            resident((H, nc_pad), lambda b: (0, 0)),                     # fc2 weight (padded)
            resident((1, nc_pad), lambda b: (0, 0)),                     # fc2 bias (padded)
        ],
        out_specs=pl.BlockSpec((tb, nc_pad), lambda b: (b, 0)),
        compiler_params=pltpu.CompilerParams(
            dimension_semantics=("parallel",),
            vmem_limit_bytes=32 * 1024 * 1024,   # >= default on v5e/v6e/v7x; raise if scaling tb/L
        ),
    )(x_flat, wc_even, wc_odd, bc_big, w1_packed, b1r, w2_pad, b2_pad)
    return out[:B, :NC]


def reference_forward(x, w_conv_pt, b_conv, w1_pt, b1, w2_pt, b2):
    """Pure-JAX f32 emulation of the PyTorch forward (NCL conv, channel-major flatten)."""
    xt = jnp.transpose(x, (0, 2, 1))                       # (B, Cin, L)
    conv = jax.lax.conv_general_dilated(
        xt, w_conv_pt, window_strides=(1,), padding=((1, 1),),
        dimension_numbers=("NCH", "OIH", "NCH"))
    conv = jnp.maximum(conv + b_conv[None, :, None], 0.0)  # (B, 64, L)
    B, C, L = conv.shape
    pooled = conv[:, :, : (L // 2) * 2].reshape(B, C, L // 2, 2).max(axis=-1)   # MaxPool1d(2)
    flat = pooled.reshape(B, -1)                           # channel-major flatten (matches .view)
    h1 = jnp.maximum(flat @ w1_pt.T + b1, 0.0)
    return h1 @ w2_pt.T + b2


if __name__ == "__main__":
    B, L, Cin, NC = 16, 16, 8, 10                          # batch, seq_len, input_dim, classes
    Cout, H = 64, 128

    key = jax.random.PRNGKey(0)
    ks = jax.random.split(key, 7)
    x = jax.random.normal(ks[0], (B, L, Cin), jnp.float32)
    # Deterministic synthetic parameters (PyTorch-native layouts).
    w_conv = jax.random.normal(ks[1], (Cout, Cin, 3), jnp.float32) * 0.2
    b_conv = jax.random.normal(ks[2], (Cout,), jnp.float32) * 0.1
    w1 = jax.random.normal(ks[3], (H, Cout * (L // 2)), jnp.float32) * 0.05
    b1 = jax.random.normal(ks[4], (H,), jnp.float32) * 0.1
    w2 = jax.random.normal(ks[5], (NC, H), jnp.float32) * 0.1
    b2 = jax.random.normal(ks[6], (NC,), jnp.float32) * 0.1

    out = simple_ann_forward(x, w_conv, b_conv, w1, b1, w2, b2)
    out = jax.block_until_ready(out)

    ref = reference_forward(x, w_conv, b_conv, w1, b1, w2, b2)
    assert out.shape == (B, NC)
    # bf16 matmul operands with f32 accumulation -> slightly looser tolerance than pure f32.
    assert jnp.allclose(out, ref, atol=5e-2, rtol=5e-2), (out, ref)
    print("KERNEL_OK")
</pallas_src>

<mosaic_0001>
module attributes {stable_mosaic.version = 11 : i64} {
  func.func @simple_ann_kernel(%arg0: i32, %arg1: memref<16x128xbf16, #tpu.memory_space<vmem>>, %arg2: memref<128x512xbf16, #tpu.memory_space<vmem>>, %arg3: memref<128x512xbf16, #tpu.memory_space<vmem>>, %arg4: memref<1x512xf32, #tpu.memory_space<vmem>>, %arg5: memref<512x128xbf16, #tpu.memory_space<vmem>>, %arg6: memref<1x128xf32, #tpu.memory_space<vmem>>, %arg7: memref<128x128xbf16, #tpu.memory_space<vmem>>, %arg8: memref<1x128xf32, #tpu.memory_space<vmem>>, %arg9: memref<16x128xf32, #tpu.memory_space<vmem>>) attributes {dimension_semantics = [#tpu.dimension_semantics<parallel>], iteration_bounds = array<i64: 1>, scalar_prefetch = 0 : i64, scratch_operands = 0 : i64, tpu.core_type = #tpu.core_type<tc>, window_params = [{transform_indices = @transform_0, window_bounds = array<i64: 16, 128>}, {pipeline_mode = #tpu.pipeline_mode<synchronous>, transform_indices = @transform_1, window_bounds = array<i64: 128, 512>}, {pipeline_mode = #tpu.pipeline_mode<synchronous>, transform_indices = @transform_2, window_bounds = array<i64: 128, 512>}, {pipeline_mode = #tpu.pipeline_mode<synchronous>, transform_indices = @transform_3, window_bounds = array<i64: 1, 512>}, {pipeline_mode = #tpu.pipeline_mode<synchronous>, transform_indices = @transform_4, window_bounds = array<i64: 512, 128>}, {pipeline_mode = #tpu.pipeline_mode<synchronous>, transform_indices = @transform_5, window_bounds = array<i64: 1, 128>}, {pipeline_mode = #tpu.pipeline_mode<synchronous>, transform_indices = @transform_6, window_bounds = array<i64: 128, 128>}, {pipeline_mode = #tpu.pipeline_mode<synchronous>, transform_indices = @transform_7, window_bounds = array<i64: 1, 128>}, {transform_indices = @transform_8, window_bounds = array<i64: 16, 128>}]} {
    %c0 = arith.constant 0 : index
    %c0_0 = arith.constant 0 : index
    %0 = vector.load %arg1[%c0, %c0_0] : memref<16x128xbf16, #tpu.memory_space<vmem>>, vector<16x128xbf16>
    %c0_1 = arith.constant 0 : index
    %c0_2 = arith.constant 0 : index
    %1 = vector.load %arg4[%c0_1, %c0_2] : memref<1x512xf32, #tpu.memory_space<vmem>>, vector<1x512xf32>
    %c0_3 = arith.constant 0 : index
    %c0_4 = arith.constant 0 : index
    %2 = vector.load %arg2[%c0_3, %c0_4] : memref<128x512xbf16, #tpu.memory_space<vmem>>, vector<128x512xbf16>
    %cst = arith.constant dense<0.000000e+00> : vector<16x512xf32>
    %3 = tpu.matmul %0, %2, %cst {dimension_numbers = #tpu.dot_dimension_numbers<[1], [0], [0], [1], [0, 0, 1, 1], [], []>} : vector<16x128xbf16>, vector<128x512xbf16>, vector<16x512xf32> -> vector<16x512xf32>
    %4 = vector.broadcast %1 : vector<1x512xf32> to vector<16x512xf32>
    %5 = arith.addf %3, %4 : vector<16x512xf32>
    %c0_5 = arith.constant 0 : index
    %c0_6 = arith.constant 0 : index
    %6 = vector.load %arg3[%c0_5, %c0_6] : memref<128x512xbf16, #tpu.memory_space<vmem>>, vector<128x512xbf16>
    %cst_7 = arith.constant dense<0.000000e+00> : vector<16x512xf32>
    %7 = tpu.matmul %0, %6, %cst_7 {dimension_numbers = #tpu.dot_dimension_numbers<[1], [0], [0], [1], [0, 0, 1, 1], [], []>} : vector<16x128xbf16>, vector<128x512xbf16>, vector<16x512xf32> -> vector<16x512xf32>
    %8 = vector.broadcast %1 : vector<1x512xf32> to vector<16x512xf32>
    %9 = arith.addf %7, %8 : vector<16x512xf32>
    %10 = arith.maximumf %5, %9 : vector<16x512xf32>
    %cst_8 = arith.constant 0.000000e+00 : f32
    %11 = vector.broadcast %cst_8 : f32 to vector<16x512xf32>
    %12 = arith.maximumf %10, %11 : vector<16x512xf32>
    %13 = arith.truncf %12 : vector<16x512xf32> to vector<16x512xbf16>
    %c0_9 = arith.constant 0 : index
    %c0_10 = arith.constant 0 : index
    %14 = vector.load %arg5[%c0_9, %c0_10] : memref<512x128xbf16, #tpu.memory_space<vmem>>, vector<512x128xbf16>
    %cst_11 = arith.constant dense<0.000000e+00> : vector<16x128xf32>
    %15 = tpu.matmul %13, %14, %cst_11 {dimension_numbers = #tpu.dot_dimension_numbers<[1], [0], [0], [1], [0, 0, 1, 1], [], []>} : vector<16x512xbf16>, vector<512x128xbf16>, vector<16x128xf32> -> vector<16x128xf32>
    %c0_12 = arith.constant 0 : index
    %c0_13 = arith.constant 0 : index
    %16 = vector.load %arg6[%c0_12, %c0_13] : memref<1x128xf32, #tpu.memory_space<vmem>>, vector<1x128xf32>
    %17 = vector.broadcast %16 : vector<1x128xf32> to vector<16x128xf32>
    %18 = arith.addf %15, %17 : vector<16x128xf32>
    %cst_14 = arith.constant 0.000000e+00 : f32
    %19 = vector.broadcast %cst_14 : f32 to vector<16x128xf32>
    %20 = arith.maximumf %18, %19 : vector<16x128xf32>
    %21 = arith.truncf %20 : vector<16x128xf32> to vector<16x128xbf16>
    %c0_15 = arith.constant 0 : index
    %c0_16 = arith.constant 0 : index
    %22 = vector.load %arg7[%c0_15, %c0_16] : memref<128x128xbf16, #tpu.memory_space<vmem>>, vector<128x128xbf16>
    %cst_17 = arith.constant dense<0.000000e+00> : vector<16x128xf32>
    %23 = tpu.matmul %21, %22, %cst_17 {dimension_numbers = #tpu.dot_dimension_numbers<[1], [0], [0], [1], [0, 0, 1, 1], [], []>} : vector<16x128xbf16>, vector<128x128xbf16>, vector<16x128xf32> -> vector<16x128xf32>
    %c0_18 = arith.constant 0 : index
    %c0_19 = arith.constant 0 : index
    %24 = vector.load %arg8[%c0_18, %c0_19] : memref<1x128xf32, #tpu.memory_space<vmem>>, vector<1x128xf32>
    %25 = vector.broadcast %24 : vector<1x128xf32> to vector<16x128xf32>
    %26 = arith.addf %23, %25 : vector<16x128xf32>
    %c0_20 = arith.constant 0 : index
    %c0_21 = arith.constant 0 : index
    %27 = vector.load %arg9[%c0_20, %c0_21] : memref<16x128xf32, #tpu.memory_space<vmem>>, vector<16x128xf32>
    tpu.vector_store %arg9[%c0_20, %c0_21], %26 {strides = array<i32>} : memref<16x128xf32, #tpu.memory_space<vmem>>, vector<16x128xf32>,
    return
  }
  func.func @transform_0(%arg0: i32) -> (i32, i32) {
    %c0_i32 = arith.constant 0 : i32
    %c0_i32_0 = arith.constant 0 : i32
    return %arg0, %c0_i32 : i32, i32
  }
  func.func @transform_1(%arg0: i32) -> (i32, i32) {
    %c0_i32 = arith.constant 0 : i32
    %c0_i32_0 = arith.constant 0 : i32
    %c0_i32_1 = arith.constant 0 : i32
    return %c0_i32, %c0_i32_0 : i32, i32
  }
  func.func @transform_2(%arg0: i32) -> (i32, i32) {
    %c0_i32 = arith.constant 0 : i32
    %c0_i32_0 = arith.constant 0 : i32
    %c0_i32_1 = arith.constant 0 : i32
    return %c0_i32, %c0_i32_0 : i32, i32
  }
  func.func @transform_3(%arg0: i32) -> (i32, i32) {
    %c0_i32 = arith.constant 0 : i32
    %c0_i32_0 = arith.constant 0 : i32
    %c0_i32_1 = arith.constant 0 : i32
    return %c0_i32, %c0_i32_0 : i32, i32
  }
  func.func @transform_4(%arg0: i32) -> (i32, i32) {
    %c0_i32 = arith.constant 0 : i32
    %c0_i32_0 = arith.constant 0 : i32
    %c0_i32_1 = arith.constant 0 : i32
    return %c0_i32, %c0_i32_0 : i32, i32
  }
  func.func @transform_5(%arg0: i32) -> (i32, i32) {
    %c0_i32 = arith.constant 0 : i32
    %c0_i32_0 = arith.constant 0 : i32
    %c0_i32_1 = arith.constant 0 : i32
    return %c0_i32, %c0_i32_0 : i32, i32
  }
  func.func @transform_6(%arg0: i32) -> (i32, i32) {
    %c0_i32 = arith.constant 0 : i32
    %c0_i32_0 = arith.constant 0 : i32
    %c0_i32_1 = arith.constant 0 : i32
    return %c0_i32, %c0_i32_0 : i32, i32
  }
  func.func @transform_7(%arg0: i32) -> (i32, i32) {
    %c0_i32 = arith.constant 0 : i32
    %c0_i32_0 = arith.constant 0 : i32
    %c0_i32_1 = arith.constant 0 : i32
    return %c0_i32, %c0_i32_0 : i32, i32
  }
  func.func @transform_8(%arg0: i32) -> (i32, i32) {
    %c0_i32 = arith.constant 0 : i32
    %c0_i32_0 = arith.constant 0 : i32
    return %arg0, %c0_i32 : i32, i32
  }
}

</mosaic_0001>

<llo_original>
// kernel: tpu_custom_call.1
$region0: #{tpu_custom_call.1}
  #allocation0 [shape = 'u32[]', space=smem, size = 0x4, offset = 0x4, fixed_abs, tag = 'smem constant byte address 0x4 - core index']
  #allocation1 [shape = 'u32[144,128]{1,0:T(1,128)}', space=vmem, size = 0x12000, scoped, tag = 'internal scratch']
  %s0 = inlined_call_operand.hbm [shape: bf16[16,128], index: 0, kind: input, shape index: {}]
  %s1 = inlined_call_operand.hbm [shape: bf16[128,512], index: 1, kind: input, shape index: {}]
  %s2 = inlined_call_operand.hbm [shape: bf16[128,512], index: 2, kind: input, shape index: {}]
  %s3 = inlined_call_operand.vmem [shape: f32[1,512], index: 3, kind: input, shape index: {}]
  %s4 = inlined_call_operand.hbm [shape: bf16[512,128], index: 4, kind: input, shape index: {}]
  %s5 = inlined_call_operand.vmem [shape: f32[1,128], index: 5, kind: input, shape index: {}]
  %s6 = inlined_call_operand.hbm [shape: bf16[128,128], index: 6, kind: input, shape index: {}]
  %s7 = inlined_call_operand.vmem [shape: f32[1,128], index: 7, kind: input, shape index: {}]
  %s8 = inlined_call_operand.hbm [shape: f32[16,128], index: 8, kind: output, shape index: {}]
  %s9 = sld [smem:[#allocation0]]
  $region62: #{tpu_custom_call.1} parent=0
    _
  %s11 = ssub.s32 1, %s9
  %s12 = scalar_select 0, %s11, %s9
  $region1: #{tpu_custom_call.1} parent=0
    #allocation2 [shape = 'u8[4096]{0}', space=vmem, size = 0x1000, scoped, tag = 'input window, operand 0, single buffered']
    #allocation3 [shape = 's32[1]{0}', space=sflag, size = 0x4, scoped, tag = 'scoped memory for tpu_custom_call.1']
    #allocation4 [shape = 's32[1]{0}', space=sflag, size = 0x4, scoped, tag = 'scoped memory for tpu_custom_call.1']
    #allocation5 [shape = 'u8[131072]{0}', space=vmem, size = 0x20000, scoped, tag = 'input window, operand 1, single buffered']
    #allocation6 [shape = 's32[1]{0}', space=sflag, size = 0x4, scoped, tag = 'scoped memory for tpu_custom_call.1']
    #allocation7 [shape = 'u8[131072]{0}', space=vmem, size = 0x20000, scoped, tag = 'input window, operand 2, single buffered']
    #allocation8 [shape = 'u8[131072]{0}', space=vmem, size = 0x20000, scoped, tag = 'input window, operand 4, single buffered']
    #allocation9 [shape = 's32[1]{0}', space=sflag, size = 0x4, scoped, tag = 'scoped memory for tpu_custom_call.1']
    #allocation10 [shape = 'u8[32768]{0}', space=vmem, size = 0x8000, scoped, tag = 'input window, operand 6, single buffered']
    #allocation11 [shape = 'u8[8192]{0}', space=vmem, size = 0x2000, scoped, tag = 'output window, operand 0, single buffered']
    %13 = vsyncpa [#allocation3], 0
    %14 = vsyncpa [#allocation6], 0
    %15 = vsyncpa [#allocation9], 0
    %16 = vsyncpa [#allocation4], 0
    // Predicated region
    $region2: #{tpu_custom_call.1} parent=1 // pred_check
      _
    $region3: #{tpu_custom_call.1} parent=1 // pred_check_branch
      %18 = sbr.rel (0) target = $region5
    $region4: #{tpu_custom_call.1} parent=1 // pred_region
      %s20 = ssub.s32 128, 128
      %21 = vsyncadd [#allocation3], %s20
      %s22 = sshll.u32 [#allocation2], 4
      %s23 = int_to_ptr.vmem [resolvable:$true] %s22
      %28 = dma.hbm_to_vmem [thread:$0]  %s0, 128, %s23, [#allocation3], 64, 64, 4
    $region5: #{tpu_custom_call.1} parent=1 // pred_fallthru
      _
    // Predicated region
    $region6: #{tpu_custom_call.1} parent=1 // pred_check
      _
    $region7: #{tpu_custom_call.1} parent=1 // pred_check_branch
      %30 = sbr.rel (0) target = $region9
    $region8: #{tpu_custom_call.1} parent=1 // pred_region
      %s32 = ssub.s32 4096, 4096
      %33 = vsyncadd [#allocation6], %s32
      %s34 = sshll.u32 [#allocation5], 4
      %s35 = int_to_ptr.vmem [resolvable:$true] %s34
      %40 = dma.hbm_to_vmem [thread:$0]  %s1, 4096, %s35, [#allocation6], 256, 256, 16
    $region9: #{tpu_custom_call.1} parent=1 // pred_fallthru
      _
    // Predicated region
    $region10: #{tpu_custom_call.1} parent=1 // pred_check
      _
    $region11: #{tpu_custom_call.1} parent=1 // pred_check_branch
      %42 = sbr.rel (0) target = $region13
    $region12: #{tpu_custom_call.1} parent=1 // pred_region
      %s44 = ssub.s32 4096, 4096
      %45 = vsyncadd [#allocation6], %s44
      %s46 = sshll.u32 [#allocation7], 4
      %s47 = int_to_ptr.vmem [resolvable:$true] %s46
      %52 = dma.hbm_to_vmem [thread:$0]  %s2, 4096, %s47, [#allocation6], 256, 256, 16
    $region13: #{tpu_custom_call.1} parent=1 // pred_fallthru
      _
    // Predicated region
    $region14: #{tpu_custom_call.1} parent=1 // pred_check
      _
    $region15: #{tpu_custom_call.1} parent=1 // pred_check_branch
      %54 = sbr.rel (0) target = $region17
    $region16: #{tpu_custom_call.1} parent=1 // pred_region
      _
    $region17: #{tpu_custom_call.1} parent=1 // pred_fallthru
      _
    // Predicated region
    $region18: #{tpu_custom_call.1} parent=1 // pred_check
      _
    $region19: #{tpu_custom_call.1} parent=1 // pred_check_branch
      %56 = sbr.rel (0) target = $region21
    $region20: #{tpu_custom_call.1} parent=1 // pred_region
      %s58 = ssub.s32 4096, 4096
      %59 = vsyncadd [#allocation9], %s58
      %s60 = sshll.u32 [#allocation8], 4
      %s61 = int_to_ptr.vmem [resolvable:$true] %s60
      %66 = dma.hbm_to_vmem [thread:$0]  %s4, 4096, %s61, [#allocation9], 64, 64, 4
    $region21: #{tpu_custom_call.1} parent=1 // pred_fallthru
      _
    // Predicated region
    $region22: #{tpu_custom_call.1} parent=1 // pred_check
      _
    $region23: #{tpu_custom_call.1} parent=1 // pred_check_branch
      %68 = sbr.rel (0) target = $region25
    $region24: #{tpu_custom_call.1} parent=1 // pred_region
      _
    $region25: #{tpu_custom_call.1} parent=1 // pred_fallthru
      _
    // Predicated region
    $region26: #{tpu_custom_call.1} parent=1 // pred_check
      _
    $region27: #{tpu_custom_call.1} parent=1 // pred_check_branch
      %70 = sbr.rel (0) target = $region29
    $region28: #{tpu_custom_call.1} parent=1 // pred_region
      %s72 = ssub.s32 1024, 1024
      %73 = vsyncadd [#allocation9], %s72
      %s74 = sshll.u32 [#allocation10], 4
      %s75 = int_to_ptr.vmem [resolvable:$true] %s74
      %80 = dma.hbm_to_vmem [thread:$0]  %s6, 1024, %s75, [#allocation9], 64, 64, 4
    $region29: #{tpu_custom_call.1} parent=1 // pred_fallthru
      _
    // Predicated region
    $region30: #{tpu_custom_call.1} parent=1 // pred_check
      _
    $region31: #{tpu_custom_call.1} parent=1 // pred_check_branch
      %82 = sbr.rel (0) target = $region33
    $region32: #{tpu_custom_call.1} parent=1 // pred_region
      _
    $region33: #{tpu_custom_call.1} parent=1 // pred_fallthru
      _
    // Predicated region
    $region34: #{tpu_custom_call.1} parent=1 // pred_check
      _
    $region35: #{tpu_custom_call.1} parent=1 // pred_check_branch
      %84 = sbr.rel (0) target = $region37
    $region36: #{tpu_custom_call.1} parent=1 // pred_region
      %85 = dma.done [#allocation3], 128
    $region37: #{tpu_custom_call.1} parent=1 // pred_fallthru
      _
    // Predicated region
    $region38: #{tpu_custom_call.1} parent=1 // pred_check
      _
    $region39: #{tpu_custom_call.1} parent=1 // pred_check_branch
      %87 = sbr.rel (0) target = $region41
    $region40: #{tpu_custom_call.1} parent=1 // pred_region
      %88 = dma.done [#allocation6], 4096
    $region41: #{tpu_custom_call.1} parent=1 // pred_fallthru
      _
    // Predicated region
    $region42: #{tpu_custom_call.1} parent=1 // pred_check
      _
    $region43: #{tpu_custom_call.1} parent=1 // pred_check_branch
      %90 = sbr.rel (0) target = $region45
    $region44: #{tpu_custom_call.1} parent=1 // pred_region
      %91 = dma.done [#allocation6], 4096
    $region45: #{tpu_custom_call.1} parent=1 // pred_fallthru
      _
    // Predicated region
    $region46: #{tpu_custom_call.1} parent=1 // pred_check
      _
    $region47: #{tpu_custom_call.1} parent=1 // pred_check_branch
      %93 = sbr.rel (0) target = $region49
    $region48: #{tpu_custom_call.1} parent=1 // pred_region
      %94 = dma.done [#allocation9], 4096
    $region49: #{tpu_custom_call.1} parent=1 // pred_fallthru
      _
    // Predicated region
    $region50: #{tpu_custom_call.1} parent=1 // pred_check
      _
    $region51: #{tpu_custom_call.1} parent=1 // pred_check_branch
      %96 = sbr.rel (0) target = $region53
    $region52: #{tpu_custom_call.1} parent=1 // pred_region
      %97 = dma.done [#allocation9], 1024
    $region53: #{tpu_custom_call.1} parent=1 // pred_fallthru
      _
    %v99 = vld [vmem:[#allocation2] sm:$0xf]
    %v100 = vld [vmem:[#allocation2 + $0x4] sm:$0xf]
    %v101 = vld [vmem:[%s3] sm:$0xf]
    %v102 = vld [vmem:[#allocation5] sm:$0xff]
    %v103 = vld [vmem:[#allocation5 + $0x8] sm:$0xff]
    %v104 = vld [vmem:[#allocation5 + $0x10] sm:$0xff]
    %v105 = vld [vmem:[#allocation5 + $0x18] sm:$0xff]
    %v106 = vld [vmem:[#allocation5 + $0x20] sm:$0xff]
    %v107 = vld [vmem:[#allocation5 + $0x28] sm:$0xff]
    %v108 = vld [vmem:[#allocation5 + $0x30] sm:$0xff]
    %v109 = vld [vmem:[#allocation5 + $0x38] sm:$0xff]
    %v110 = vld [vmem:[#allocation5 + $0x40] sm:$0xff]
    %v111 = vld [vmem:[#allocation5 + $0x48] sm:$0xff]
    %v112 = vld [vmem:[#allocation5 + $0x50] sm:$0xff]
    %v113 = vld [vmem:[#allocation5 + $0x58] sm:$0xff]
    %v114 = vld [vmem:[#allocation5 + $0x60] sm:$0xff]
    %v115 = vld [vmem:[#allocation5 + $0x68] sm:$0xff]
    %v116 = vld [vmem:[#allocation5 + $0x70] sm:$0xff]
    %v117 = vld [vmem:[#allocation5 + $0x78] sm:$0xff]
    %v118 = vld [vmem:[#allocation5 + $0x80] sm:$0xff]
    %v119 = vld [vmem:[#allocation5 + $0x88] sm:$0xff]
    %v120 = vld [vmem:[#allocation5 + $0x90] sm:$0xff]
    %v121 = vld [vmem:[#allocation5 + $0x98] sm:$0xff]
    %v122 = vld [vmem:[#allocation5 + $0xa0] sm:$0xff]
    %v123 = vld [vmem:[#allocation5 + $0xa8] sm:$0xff]
    %v124 = vld [vmem:[#allocation5 + $0xb0] sm:$0xff]
    %v125 = vld [vmem:[#allocation5 + $0xb8] sm:$0xff]
    %v126 = vld [vmem:[#allocation5 + $0xc0] sm:$0xff]
    %v127 = vld [vmem:[#allocation5 + $0xc8] sm:$0xff]
    %v128 = vld [vmem:[#allocation5 + $0xd0] sm:$0xff]
    %v129 = vld [vmem:[#allocation5 + $0xd8] sm:$0xff]
    %v130 = vld [vmem:[#allocation5 + $0xe0] sm:$0xff]
    %v131 = vld [vmem:[#allocation5 + $0xe8] sm:$0xff]
    %v132 = vld [vmem:[#allocation5 + $0xf0] sm:$0xff]
    %v133 = vld [vmem:[#allocation5 + $0xf8] sm:$0xff]
    %v135 = vlaneseq
    %v136 = vshrl.u32 %v135, 7
    %v137 = vsub.s32 0, %v136
    %v138 = vrot.slane %v101, %v137
    %v139 = vlaneseq
    %v140 = vshrl.u32 %v139, 7
    %v141 = vsub.s32 1, %v140
    %v142 = vrot.slane %v101, %v141
    %v143 = vlaneseq
    %v144 = vshrl.u32 %v143, 7
    %v145 = vsub.s32 2, %v144
    %v146 = vrot.slane %v101, %v145
    %v147 = vlaneseq
    %v148 = vshrl.u32 %v147, 7
    %v149 = vsub.s32 3, %v148
    %v150 = vrot.slane %v101, %v149
    %v157 = vunpack.c.l.b16 %v99
    %v158 = vunpack.c.l.b16 %v100
    %v159 = vpack.c.b16 %v158, %v157
    %v193 = vunpack.c.l.b16 %v102
    %v194 = vunpack.c.h.b16 %v102
    %v195 = vunpack.c.l.b16 %v103
    %v196 = vunpack.c.h.b16 %v103
    %v197 = vunpack.c.l.b16 %v104
    %v198 = vunpack.c.h.b16 %v104
    %v199 = vunpack.c.l.b16 %v105
    %v200 = vunpack.c.h.b16 %v105
    %v201 = vunpack.c.l.b16 %v106
    %v202 = vunpack.c.h.b16 %v106
    %v203 = vunpack.c.l.b16 %v107
    %v204 = vunpack.c.h.b16 %v107
    %v205 = vunpack.c.l.b16 %v108
    %v206 = vunpack.c.h.b16 %v108
    %v207 = vunpack.c.l.b16 %v109
    %v208 = vunpack.c.h.b16 %v109
    %v209 = vunpack.c.l.b16 %v110
    %v210 = vunpack.c.h.b16 %v110
    %v211 = vunpack.c.l.b16 %v111
    %v212 = vunpack.c.h.b16 %v111
    %v213 = vunpack.c.l.b16 %v112
    %v214 = vunpack.c.h.b16 %v112
    %v215 = vunpack.c.l.b16 %v113
    %v216 = vunpack.c.h.b16 %v113
    %v217 = vunpack.c.l.b16 %v114
    %v218 = vunpack.c.h.b16 %v114
    %v219 = vunpack.c.l.b16 %v115
    %v220 = vunpack.c.h.b16 %v115
    %v221 = vunpack.c.l.b16 %v116
    %v222 = vunpack.c.h.b16 %v116
    %v223 = vunpack.c.l.b16 %v117
    %v224 = vunpack.c.h.b16 %v117
    %v225 = vunpack.c.l.b16 %v118
    %v226 = vunpack.c.h.b16 %v118
    %v227 = vunpack.c.l.b16 %v119
    %v228 = vunpack.c.h.b16 %v119
    %v229 = vunpack.c.l.b16 %v120
    %v230 = vunpack.c.h.b16 %v120
    %v231 = vunpack.c.l.b16 %v121
    %v232 = vunpack.c.h.b16 %v121
    %v233 = vunpack.c.l.b16 %v122
    %v234 = vunpack.c.h.b16 %v122
    %v235 = vunpack.c.l.b16 %v123
    %v236 = vunpack.c.h.b16 %v123
    %v237 = vunpack.c.l.b16 %v124
    %v238 = vunpack.c.h.b16 %v124
    %v239 = vunpack.c.l.b16 %v125
    %v240 = vunpack.c.h.b16 %v125
    %v241 = vunpack.c.l.b16 %v126
    %v242 = vunpack.c.h.b16 %v126
    %v243 = vunpack.c.l.b16 %v127
    %v244 = vunpack.c.h.b16 %v127
    %v245 = vunpack.c.l.b16 %v128
    %v246 = vunpack.c.h.b16 %v128
    %v247 = vunpack.c.l.b16 %v129
    %v248 = vunpack.c.h.b16 %v129
    %v249 = vunpack.c.l.b16 %v130
    %v250 = vunpack.c.h.b16 %v130
    %v251 = vunpack.c.l.b16 %v131
    %v252 = vunpack.c.h.b16 %v131
    %v253 = vunpack.c.l.b16 %v132
    %v254 = vunpack.c.h.b16 %v132
    %v255 = vunpack.c.l.b16 %v133
    %v256 = vunpack.c.h.b16 %v133
    %v257 = vpack.c.b16 %v197, %v193
    %v258 = vpack.c.b16 %v198, %v194
    %v259 = vpack.c.b16 %v199, %v195
    %v260 = vpack.c.b16 %v200, %v196
    %v261 = vpack.c.b16 %v205, %v201
    %v262 = vpack.c.b16 %v206, %v202
    %v263 = vpack.c.b16 %v207, %v203
    %v264 = vpack.c.b16 %v208, %v204
    %v265 = vpack.c.b16 %v213, %v209
    %v266 = vpack.c.b16 %v214, %v210
    %v267 = vpack.c.b16 %v215, %v211
    %v268 = vpack.c.b16 %v216, %v212
    %v269 = vpack.c.b16 %v221, %v217
    %v270 = vpack.c.b16 %v222, %v218
    %v271 = vpack.c.b16 %v223, %v219
    %v272 = vpack.c.b16 %v224, %v220
    %v273 = vpack.c.b16 %v229, %v225
    %v274 = vpack.c.b16 %v230, %v226
    %v275 = vpack.c.b16 %v231, %v227
    %v276 = vpack.c.b16 %v232, %v228
    %v277 = vpack.c.b16 %v237, %v233
    %v278 = vpack.c.b16 %v238, %v234
    %v279 = vpack.c.b16 %v239, %v235
    %v280 = vpack.c.b16 %v240, %v236
    %v281 = vpack.c.b16 %v245, %v241
    %v282 = vpack.c.b16 %v246, %v242
    %v283 = vpack.c.b16 %v247, %v243
    %v284 = vpack.c.b16 %v248, %v244
    %v285 = vpack.c.b16 %v253, %v249
    %v286 = vpack.c.b16 %v254, %v250
    %v287 = vpack.c.b16 %v255, %v251
    %v288 = vpack.c.b16 %v256, %v252
    %321 = vmatprep.subr.bf16.mxu0 %v258
    %322 = vmatpush1.bf16.msra.mxu0 %v257
    %323 = vmatprep.subr.bf16.mxu0 %v262
    %324 = vmatpush1.bf16.msra.mxu0 %v261
    %325 = vmatprep.subr.bf16.mxu0 %v266
    %326 = vmatpush1.bf16.msra.mxu0 %v265
    %327 = vmatprep.subr.bf16.mxu0 %v270
    %328 = vmatpush1.bf16.msra.mxu0 %v269
    %329 = vmatprep.subr.bf16.mxu0 %v274
    %330 = vmatpush1.bf16.msra.mxu0 %v273
    %331 = vmatprep.subr.bf16.mxu0 %v278
    %332 = vmatpush1.bf16.msra.mxu0 %v277
    %333 = vmatprep.subr.bf16.mxu0 %v282
    %334 = vmatpush1.bf16.msra.mxu0 %v281
    %335 = vmatprep.subr.bf16.mxu0 %v286
    %336 = vmatpush1.bf16.msra.mxu0 %v285
    %337 = vmatprep.subr.bf16.mxu0 0
    %338 = vmatpush1.bf16.msra.mxu0 0
    %339 = vmatprep.subr.bf16.mxu0 0
    %340 = vmatpush1.bf16.msra.mxu0 0
    %341 = vmatprep.subr.bf16.mxu0 0
    %342 = vmatpush1.bf16.msra.mxu0 0
    %343 = vmatprep.subr.bf16.mxu0 0
    %344 = vmatpush1.bf16.msra.mxu0 0
    %345 = vmatprep.subr.bf16.mxu0 0
    %346 = vmatpush1.bf16.msra.mxu0 0
    %347 = vmatprep.subr.bf16.mxu0 0
    %348 = vmatpush1.bf16.msra.mxu0 0
    %349 = vmatprep.subr.bf16.mxu0 0
    %350 = vmatpush1.bf16.msra.mxu0 0
    %351 = vmatprep.subr.bf16.mxu0 0
    %352 = vmatpush1.bf16.msra.mxu0 0
    %353 = vmatprep.mubr.bf16.mxu0 0
    %354 = vmatmul.mubr.bf16.gmra.mrb[0].mxu0 %v159
    %v355 = vpop.f32.mrb[0].mxu0
    %v356 = vadd.f32 %v138, %v355
    %v357 = vpop.f32.mrb[0].mxu0
    %v358 = vadd.f32 %v142, %v357
    %v359 = vpop.f32.mrb[0].mxu0
    %v360 = vadd.f32 %v138, %v359
    %v361 = vpop.f32.mrb[0].mxu0
    %v362 = vadd.f32 %v142, %v361
    %363 = vdwg.mxu0
    %364 = vmatprep.subr.bf16.mxu0 %v260
    %365 = vmatpush1.bf16.msra.mxu0 %v259
    %366 = vmatprep.subr.bf16.mxu0 %v264
    %367 = vmatpush1.bf16.msra.mxu0 %v263
    %368 = vmatprep.subr.bf16.mxu0 %v268
    %369 = vmatpush1.bf16.msra.mxu0 %v267
    %370 = vmatprep.subr.bf16.mxu0 %v272
    %371 = vmatpush1.bf16.msra.mxu0 %v271
    %372 = vmatprep.subr.bf16.mxu0 %v276
    %373 = vmatpush1.bf16.msra.mxu0 %v275
    %374 = vmatprep.subr.bf16.mxu0 %v280
    %375 = vmatpush1.bf16.msra.mxu0 %v279
    %376 = vmatprep.subr.bf16.mxu0 %v284
    %377 = vmatpush1.bf16.msra.mxu0 %v283
    %378 = vmatprep.subr.bf16.mxu0 %v288
    %379 = vmatpush1.bf16.msra.mxu0 %v287
    %380 = vmatprep.subr.bf16.mxu0 0
    %381 = vmatpush1.bf16.msra.mxu0 0
    %382 = vmatprep.subr.bf16.mxu0 0
    %383 = vmatpush1.bf16.msra.mxu0 0
    %384 = vmatprep.subr.bf16.mxu0 0
    %385 = vmatpush1.bf16.msra.mxu0 0
    %386 = vmatprep.subr.bf16.mxu0 0
    %387 = vmatpush1.bf16.msra.mxu0 0
    %388 = vmatprep.subr.bf16.mxu0 0
    %389 = vmatpush1.bf16.msra.mxu0 0
    %390 = vmatprep.subr.bf16.mxu0 0
    %391 = vmatpush1.bf16.msra.mxu0 0
    %392 = vmatprep.subr.bf16.mxu0 0
    %393 = vmatpush1.bf16.msra.mxu0 0
    %394 = vmatprep.subr.bf16.mxu0 0
    %395 = vmatpush1.bf16.msra.mxu0 0
    %396 = vmatprep.mubr.bf16.mxu0 0
    %397 = vmatmul.mubr.bf16.gmra.mrb[0].mxu0 %v159
    %v398 = vpop.f32.mrb[0].mxu0
    %v399 = vadd.f32 %v146, %v398
    %v400 = vpop.f32.mrb[0].mxu0
    %v401 = vadd.f32 %v150, %v400
    %v402 = vpop.f32.mrb[0].mxu0
    %v403 = vadd.f32 %v146, %v402
    %v404 = vpop.f32.mrb[0].mxu0
    %v405 = vadd.f32 %v150, %v404
    %406 = vdwg.mxu0
    %v407 = vld [vmem:[#allocation7] sm:$0xff]
    %v408 = vld [vmem:[#allocation7 + $0x8] sm:$0xff]
    %v409 = vld [vmem:[#allocation7 + $0x10] sm:$0xff]
    %v410 = vld [vmem:[#allocation7 + $0x18] sm:$0xff]
    %v411 = vld [vmem:[#allocation7 + $0x20] sm:$0xff]
    %v412 = vld [vmem:[#allocation7 + $0x28] sm:$0xff]
    %v413 = vld [vmem:[#allocation7 + $0x30] sm:$0xff]
    %v414 = vld [vmem:[#allocation7 + $0x38] sm:$0xff]
    %v415 = vld [vmem:[#allocation7 + $0x40] sm:$0xff]
    %v416 = vld [vmem:[#allocation7 + $0x48] sm:$0xff]
    %v417 = vld [vmem:[#allocation7 + $0x50] sm:$0xff]
    %v418 = vld [vmem:[#allocation7 + $0x58] sm:$0xff]
    %v419 = vld [vmem:[#allocation7 + $0x60] sm:$0xff]
    %v420 = vld [vmem:[#allocation7 + $0x68] sm:$0xff]
    %v421 = vld [vmem:[#allocation7 + $0x70] sm:$0xff]
    %v422 = vld [vmem:[#allocation7 + $0x78] sm:$0xff]
    %v423 = vld [vmem:[#allocation7 + $0x80] sm:$0xff]
    %v424 = vld [vmem:[#allocation7 + $0x88] sm:$0xff]
    %v425 = vld [vmem:[#allocation7 + $0x90] sm:$0xff]
    %v426 = vld [vmem:[#allocation7 + $0x98] sm:$0xff]
    %v427 = vld [vmem:[#allocation7 + $0xa0] sm:$0xff]
    %v428 = vld [vmem:[#allocation7 + $0xa8] sm:$0xff]
    %v429 = vld [vmem:[#allocation7 + $0xb0] sm:$0xff]
    %v430 = vld [vmem:[#allocation7 + $0xb8] sm:$0xff]
    %v431 = vld [vmem:[#allocation7 + $0xc0] sm:$0xff]
    %v432 = vld [vmem:[#allocation7 + $0xc8] sm:$0xff]
    %v433 = vld [vmem:[#allocation7 + $0xd0] sm:$0xff]
    %v434 = vld [vmem:[#allocation7 + $0xd8] sm:$0xff]
    %v435 = vld [vmem:[#allocation7 + $0xe0] sm:$0xff]
    %v436 = vld [vmem:[#allocation7 + $0xe8] sm:$0xff]
    %v437 = vld [vmem:[#allocation7 + $0xf0] sm:$0xff]
    %v438 = vld [vmem:[#allocation7 + $0xf8] sm:$0xff]
    %v471 = vunpack.c.l.b16 %v407
    %v472 = vunpack.c.h.b16 %v407
    %v473 = vunpack.c.l.b16 %v408
    %v474 = vunpack.c.h.b16 %v408
    %v475 = vunpack.c.l.b16 %v409
    %v476 = vunpack.c.h.b16 %v409
    %v477 = vunpack.c.l.b16 %v410
    %v478 = vunpack.c.h.b16 %v410
    %v479 = vunpack.c.l.b16 %v411
    %v480 = vunpack.c.h.b16 %v411
    %v481 = vunpack.c.l.b16 %v412
    %v482 = vunpack.c.h.b16 %v412
    %v483 = vunpack.c.l.b16 %v413
    %v484 = vunpack.c.h.b16 %v413
    %v485 = vunpack.c.l.b16 %v414
    %v486 = vunpack.c.h.b16 %v414
    %v487 = vunpack.c.l.b16 %v415
    %v488 = vunpack.c.h.b16 %v415
    %v489 = vunpack.c.l.b16 %v416
    %v490 = vunpack.c.h.b16 %v416
    %v491 = vunpack.c.l.b16 %v417
    %v492 = vunpack.c.h.b16 %v417
    %v493 = vunpack.c.l.b16 %v418
    %v494 = vunpack.c.h.b16 %v418
    %v495 = vunpack.c.l.b16 %v419
    %v496 = vunpack.c.h.b16 %v419
    %v497 = vunpack.c.l.b16 %v420
    %v498 = vunpack.c.h.b16 %v420
    %v499 = vunpack.c.l.b16 %v421
    %v500 = vunpack.c.h.b16 %v421
    %v501 = vunpack.c.l.b16 %v422
    %v502 = vunpack.c.h.b16 %v422
    %v503 = vunpack.c.l.b16 %v423
    %v504 = vunpack.c.h.b16 %v423
    %v505 = vunpack.c.l.b16 %v424
    %v506 = vunpack.c.h.b16 %v424
    %v507 = vunpack.c.l.b16 %v425
    %v508 = vunpack.c.h.b16 %v425
    %v509 = vunpack.c.l.b16 %v426
    %v510 = vunpack.c.h.b16 %v426
    %v511 = vunpack.c.l.b16 %v427
    %v512 = vunpack.c.h.b16 %v427
    %v513 = vunpack.c.l.b16 %v428
    %v514 = vunpack.c.h.b16 %v428
    %v515 = vunpack.c.l.b16 %v429
    %v516 = vunpack.c.h.b16 %v429
    %v517 = vunpack.c.l.b16 %v430
    %v518 = vunpack.c.h.b16 %v430
    %v519 = vunpack.c.l.b16 %v431
    %v520 = vunpack.c.h.b16 %v431
    %v521 = vunpack.c.l.b16 %v432
    %v522 = vunpack.c.h.b16 %v432
    %v523 = vunpack.c.l.b16 %v433
    %v524 = vunpack.c.h.b16 %v433
    %v525 = vunpack.c.l.b16 %v434
    %v526 = vunpack.c.h.b16 %v434
    %v527 = vunpack.c.l.b16 %v435
    %v528 = vunpack.c.h.b16 %v435
    %v529 = vunpack.c.l.b16 %v436
    %v530 = vunpack.c.h.b16 %v436
    %v531 = vunpack.c.l.b16 %v437
    %v532 = vunpack.c.h.b16 %v437
    %v533 = vunpack.c.l.b16 %v438
    %v534 = vunpack.c.h.b16 %v438
    %v535 = vpack.c.b16 %v475, %v471
    %v536 = vpack.c.b16 %v476, %v472
    %v537 = vpack.c.b16 %v477, %v473
    %v538 = vpack.c.b16 %v478, %v474
    %v539 = vpack.c.b16 %v483, %v479
    %v540 = vpack.c.b16 %v484, %v480
    %v541 = vpack.c.b16 %v485, %v481
    %v542 = vpack.c.b16 %v486, %v482
    %v543 = vpack.c.b16 %v491, %v487
    %v544 = vpack.c.b16 %v492, %v488
    %v545 = vpack.c.b16 %v493, %v489
    %v546 = vpack.c.b16 %v494, %v490
    %v547 = vpack.c.b16 %v499, %v495
    %v548 = vpack.c.b16 %v500, %v496
    %v549 = vpack.c.b16 %v501, %v497
    %v550 = vpack.c.b16 %v502, %v498
    %v551 = vpack.c.b16 %v507, %v503
    %v552 = vpack.c.b16 %v508, %v504
    %v553 = vpack.c.b16 %v509, %v505
    %v554 = vpack.c.b16 %v510, %v506
    %v555 = vpack.c.b16 %v515, %v511
    %v556 = vpack.c.b16 %v516, %v512
    %v557 = vpack.c.b16 %v517, %v513
    %v558 = vpack.c.b16 %v518, %v514
    %v559 = vpack.c.b16 %v523, %v519
    %v560 = vpack.c.b16 %v524, %v520
    %v561 = vpack.c.b16 %v525, %v521
    %v562 = vpack.c.b16 %v526, %v522
    %v563 = vpack.c.b16 %v531, %v527
    %v564 = vpack.c.b16 %v532, %v528
    %v565 = vpack.c.b16 %v533, %v529
    %v566 = vpack.c.b16 %v534, %v530
    %599 = vmatprep.subr.bf16.mxu0 %v536
    %600 = vmatpush1.bf16.msra.mxu0 %v535
    %601 = vmatprep.subr.bf16.mxu0 %v540
    %602 = vmatpush1.bf16.msra.mxu0 %v539
    %603 = vmatprep.subr.bf16.mxu0 %v544
    %604 = vmatpush1.bf16.msra.mxu0 %v543
    %605 = vmatprep.subr.bf16.mxu0 %v548
    %606 = vmatpush1.bf16.msra.mxu0 %v547
    %607 = vmatprep.subr.bf16.mxu0 %v552
    %608 = vmatpush1.bf16.msra.mxu0 %v551
    %609 = vmatprep.subr.bf16.mxu0 %v556
    %610 = vmatpush1.bf16.msra.mxu0 %v555
    %611 = vmatprep.subr.bf16.mxu0 %v560
    %612 = vmatpush1.bf16.msra.mxu0 %v559
    %613 = vmatprep.subr.bf16.mxu0 %v564
    %614 = vmatpush1.bf16.msra.mxu0 %v563
    %615 = vmatprep.subr.bf16.mxu0 0
    %616 = vmatpush1.bf16.msra.mxu0 0
    %617 = vmatprep.subr.bf16.mxu0 0
    %618 = vmatpush1.bf16.msra.mxu0 0
    %619 = vmatprep.subr.bf16.mxu0 0
    %620 = vmatpush1.bf16.msra.mxu0 0
    %621 = vmatprep.subr.bf16.mxu0 0
    %622 = vmatpush1.bf16.msra.mxu0 0
    %623 = vmatprep.subr.bf16.mxu0 0
    %624 = vmatpush1.bf16.msra.mxu0 0
    %625 = vmatprep.subr.bf16.mxu0 0
    %626 = vmatpush1.bf16.msra.mxu0 0
    %627 = vmatprep.subr.bf16.mxu0 0
    %628 = vmatpush1.bf16.msra.mxu0 0
    %629 = vmatprep.subr.bf16.mxu0 0
    %630 = vmatpush1.bf16.msra.mxu0 0
    %631 = vmatprep.mubr.bf16.mxu0 0
    %632 = vmatmul.mubr.bf16.gmra.mrb[0].mxu0 %v159
    %v633 = vpop.f32.mrb[0].mxu0
    %v634 = vadd.f32 %v138, %v633
    %v635 = vpop.f32.mrb[0].mxu0
    %v636 = vadd.f32 %v142, %v635
    %v637 = vpop.f32.mrb[0].mxu0
    %v638 = vadd.f32 %v138, %v637
    %v639 = vpop.f32.mrb[0].mxu0
    %v640 = vadd.f32 %v142, %v639
    %641 = vdwg.mxu0
    %642 = vmatprep.subr.bf16.mxu0 %v538
    %643 = vmatpush1.bf16.msra.mxu0 %v537
    %644 = vmatprep.subr.bf16.mxu0 %v542
    %645 = vmatpush1.bf16.msra.mxu0 %v541
    %646 = vmatprep.subr.bf16.mxu0 %v546
    %647 = vmatpush1.bf16.msra.mxu0 %v545
    %648 = vmatprep.subr.bf16.mxu0 %v550
    %649 = vmatpush1.bf16.msra.mxu0 %v549
    %650 = vmatprep.subr.bf16.mxu0 %v554
    %651 = vmatpush1.bf16.msra.mxu0 %v553
    %652 = vmatprep.subr.bf16.mxu0 %v558
    %653 = vmatpush1.bf16.msra.mxu0 %v557
    %654 = vmatprep.subr.bf16.mxu0 %v562
    %655 = vmatpush1.bf16.msra.mxu0 %v561
    %656 = vmatprep.subr.bf16.mxu0 %v566
    %657 = vmatpush1.bf16.msra.mxu0 %v565
    %658 = vmatprep.subr.bf16.mxu0 0
    %659 = vmatpush1.bf16.msra.mxu0 0
    %660 = vmatprep.subr.bf16.mxu0 0
    %661 = vmatpush1.bf16.msra.mxu0 0
    %662 = vmatprep.subr.bf16.mxu0 0
    %663 = vmatpush1.bf16.msra.mxu0 0
    %664 = vmatprep.subr.bf16.mxu0 0
    %665 = vmatpush1.bf16.msra.mxu0 0
    %666 = vmatprep.subr.bf16.mxu0 0
    %667 = vmatpush1.bf16.msra.mxu0 0
    %668 = vmatprep.subr.bf16.mxu0 0
    %669 = vmatpush1.bf16.msra.mxu0 0
    %670 = vmatprep.subr.bf16.mxu0 0
    %671 = vmatpush1.bf16.msra.mxu0 0
    %672 = vmatprep.subr.bf16.mxu0 0
    %673 = vmatpush1.bf16.msra.mxu0 0
    %674 = vmatprep.mubr.bf16.mxu0 0
    %675 = vmatmul.mubr.bf16.gmra.mrb[0].mxu0 %v159
    %v676 = vpop.f32.mrb[0].mxu0
    %v677 = vadd.f32 %v146, %v676
    %v678 = vpop.f32.mrb[0].mxu0
    %v679 = vadd.f32 %v150, %v678
    %v680 = vpop.f32.mrb[0].mxu0
    %v681 = vadd.f32 %v146, %v680
    %v682 = vpop.f32.mrb[0].mxu0
    %v683 = vadd.f32 %v150, %v682
    %684 = vdwg.mxu0
    %v685 = vmax.f32 %v356, %v634
    %v686 = vmax.f32 %v358, %v636
    %v687 = vmax.f32 %v399, %v677
    %v688 = vmax.f32 %v401, %v679
    %v689 = vmax.f32 %v360, %v638
    %v690 = vmax.f32 %v362, %v640
    %v691 = vmax.f32 %v403, %v681
    %v692 = vmax.f32 %v405, %v683
    %v693 = vmax.f32 %v685, 0.0
    %v694 = vmax.f32 %v686, 0.0
    %v695 = vmax.f32 %v687, 0.0
    %v696 = vmax.f32 %v688, 0.0
    %v697 = vmax.f32 %v689, 0.0
    %v698 = vmax.f32 %v690, 0.0
    %v699 = vmax.f32 %v691, 0.0
    %v700 = vmax.f32 %v692, 0.0
    %v701 = vpack.c.bf16 %v697, %v693
    %v702 = vpack.c.bf16 %v698, %v694
    %v703 = vpack.c.bf16 %v699, %v695
    %v704 = vpack.c.bf16 %v700, %v696
    %v705 = vld [vmem:[#allocation8] sm:$0xf]
    %v706 = vld [vmem:[#allocation8 + $0x4] sm:$0xf]
    %v707 = vld [vmem:[#allocation8 + $0x8] sm:$0xf]
    %v708 = vld [vmem:[#allocation8 + $0xc] sm:$0xf]
    %v709 = vld [vmem:[#allocation8 + $0x10] sm:$0xf]
    %v710 = vld [vmem:[#allocation8 + $0x14] sm:$0xf]
    %v711 = vld [vmem:[#allocation8 + $0x18] sm:$0xf]
    %v712 = vld [vmem:[#allocation8 + $0x1c] sm:$0xf]
    %v713 = vld [vmem:[#allocation8 + $0x20] sm:$0xf]
    %v714 = vld [vmem:[#allocation8 + $0x24] sm:$0xf]
    %v715 = vld [vmem:[#allocation8 + $0x28] sm:$0xf]
    %v716 = vld [vmem:[#allocation8 + $0x2c] sm:$0xf]
    %v717 = vld [vmem:[#allocation8 + $0x30] sm:$0xf]
    %v718 = vld [vmem:[#allocation8 + $0x34] sm:$0xf]
    %v719 = vld [vmem:[#allocation8 + $0x38] sm:$0xf]
    %v720 = vld [vmem:[#allocation8 + $0x3c] sm:$0xf]
    %v721 = vld [vmem:[#allocation8 + $0x40] sm:$0xf]
    %v722 = vld [vmem:[#allocation8 + $0x44] sm:$0xf]
    %v723 = vld [vmem:[#allocation8 + $0x48] sm:$0xf]
    %v724 = vld [vmem:[#allocation8 + $0x4c] sm:$0xf]
    %v725 = vld [vmem:[#allocation8 + $0x50] sm:$0xf]
    %v726 = vld [vmem:[#allocation8 + $0x54] sm:$0xf]
    %v727 = vld [vmem:[#allocation8 + $0x58] sm:$0xf]
    %v728 = vld [vmem:[#allocation8 + $0x5c] sm:$0xf]
    %v729 = vld [vmem:[#allocation8 + $0x60] sm:$0xf]
    %v730 = vld [vmem:[#allocation8 + $0x64] sm:$0xf]
    %v731 = vld [vmem:[#allocation8 + $0x68] sm:$0xf]
    %v732 = vld [vmem:[#allocation8 + $0x6c] sm:$0xf]
    %v733 = vld [vmem:[#allocation8 + $0x70] sm:$0xf]
    %v734 = vld [vmem:[#allocation8 + $0x74] sm:$0xf]
    %v735 = vld [vmem:[#allocation8 + $0x78] sm:$0xf]
    %v736 = vld [vmem:[#allocation8 + $0x7c] sm:$0xf]
    %v737 = vld [vmem:[#allocation8 + $0x80] sm:$0xf]
    %v738 = vld [vmem:[#allocation8 + $0x84] sm:$0xf]
    %v739 = vld [vmem:[#allocation8 + $0x88] sm:$0xf]
    %v740 = vld [vmem:[#allocation8 + $0x8c] sm:$0xf]
    %v741 = vld [vmem:[#allocation8 + $0x90] sm:$0xf]
    %v742 = vld [vmem:[#allocation8 + $0x94] sm:$0xf]
    %v743 = vld [vmem:[#allocation8 + $0x98] sm:$0xf]
    %v744 = vld [vmem:[#allocation8 + $0x9c] sm:$0xf]
    %v745 = vld [vmem:[#allocation8 + $0xa0] sm:$0xf]
    %v746 = vld [vmem:[#allocation8 + $0xa4] sm:$0xf]
    %v747 = vld [vmem:[#allocation8 + $0xa8] sm:$0xf]
    %v748 = vld [vmem:[#allocation8 + $0xac] sm:$0xf]
    %v749 = vld [vmem:[#allocation8 + $0xb0] sm:$0xf]
    %v750 = vld [vmem:[#allocation8 + $0xb4] sm:$0xf]
    %v751 = vld [vmem:[#allocation8 + $0xb8] sm:$0xf]
    %v752 = vld [vmem:[#allocation8 + $0xbc] sm:$0xf]
    %v753 = vld [vmem:[#allocation8 + $0xc0] sm:$0xf]
    %v754 = vld [vmem:[#allocation8 + $0xc4] sm:$0xf]
    %v755 = vld [vmem:[#allocation8 + $0xc8] sm:$0xf]
    %v756 = vld [vmem:[#allocation8 + $0xcc] sm:$0xf]
    %v757 = vld [vmem:[#allocation8 + $0xd0] sm:$0xf]
    %v758 = vld [vmem:[#allocation8 + $0xd4] sm:$0xf]
    %v759 = vld [vmem:[#allocation8 + $0xd8] sm:$0xf]
    %v760 = vld [vmem:[#allocation8 + $0xdc] sm:$0xf]
    %v761 = vld [vmem:[#allocation8 + $0xe0] sm:$0xf]
    %v762 = vld [vmem:[#allocation8 + $0xe4] sm:$0xf]
    %v763 = vld [vmem:[#allocation8 + $0xe8] sm:$0xf]
    %v764 = vld [vmem:[#allocation8 + $0xec] sm:$0xf]
    %v765 = vld [vmem:[#allocation8 + $0xf0] sm:$0xf]
    %v766 = vld [vmem:[#allocation8 + $0xf4] sm:$0xf]
    %v767 = vld [vmem:[#allocation8 + $0xf8] sm:$0xf]
    %v768 = vld [vmem:[#allocation8 + $0xfc] sm:$0xf]
    %v769 = vld [vmem:[%s5] sm:$0x1]
    %v771 = vlaneseq
    %v772 = vshrl.u32 %v771, 7
    %v773 = vsub.s32 0, %v772
    %v774 = vrot.slane %v769, %v773
    %v840 = vunpack.c.l.b16 %v705
    %v841 = vunpack.c.l.b16 %v706
    %v842 = vunpack.c.l.b16 %v707
    %v843 = vunpack.c.l.b16 %v708
    %v844 = vunpack.c.l.b16 %v709
    %v845 = vunpack.c.l.b16 %v710
    %v846 = vunpack.c.l.b16 %v711
    %v847 = vunpack.c.l.b16 %v712
    %v848 = vunpack.c.l.b16 %v713
    %v849 = vunpack.c.l.b16 %v714
    %v850 = vunpack.c.l.b16 %v715
    %v851 = vunpack.c.l.b16 %v716
    %v852 = vunpack.c.l.b16 %v717
    %v853 = vunpack.c.l.b16 %v718
    %v854 = vunpack.c.l.b16 %v719
    %v855 = vunpack.c.l.b16 %v720
    %v856 = vunpack.c.l.b16 %v721
    %v857 = vunpack.c.l.b16 %v722
    %v858 = vunpack.c.l.b16 %v723
    %v859 = vunpack.c.l.b16 %v724
    %v860 = vunpack.c.l.b16 %v725
    %v861 = vunpack.c.l.b16 %v726
    %v862 = vunpack.c.l.b16 %v727
    %v863 = vunpack.c.l.b16 %v728
    %v864 = vunpack.c.l.b16 %v729
    %v865 = vunpack.c.l.b16 %v730
    %v866 = vunpack.c.l.b16 %v731
    %v867 = vunpack.c.l.b16 %v732
    %v868 = vunpack.c.l.b16 %v733
    %v869 = vunpack.c.l.b16 %v734
    %v870 = vunpack.c.l.b16 %v735
    %v871 = vunpack.c.l.b16 %v736
    %v872 = vunpack.c.l.b16 %v737
    %v873 = vunpack.c.l.b16 %v738
    %v874 = vunpack.c.l.b16 %v739
    %v875 = vunpack.c.l.b16 %v740
    %v876 = vunpack.c.l.b16 %v741
    %v877 = vunpack.c.l.b16 %v742
    %v878 = vunpack.c.l.b16 %v743
    %v879 = vunpack.c.l.b16 %v744
    %v880 = vunpack.c.l.b16 %v745
    %v881 = vunpack.c.l.b16 %v746
    %v882 = vunpack.c.l.b16 %v747
    %v883 = vunpack.c.l.b16 %v748
    %v884 = vunpack.c.l.b16 %v749
    %v885 = vunpack.c.l.b16 %v750
    %v886 = vunpack.c.l.b16 %v751
    %v887 = vunpack.c.l.b16 %v752
    %v888 = vunpack.c.l.b16 %v753
    %v889 = vunpack.c.l.b16 %v754
    %v890 = vunpack.c.l.b16 %v755
    %v891 = vunpack.c.l.b16 %v756
    %v892 = vunpack.c.l.b16 %v757
    %v893 = vunpack.c.l.b16 %v758
    %v894 = vunpack.c.l.b16 %v759
    %v895 = vunpack.c.l.b16 %v760
    %v896 = vunpack.c.l.b16 %v761
    %v897 = vunpack.c.l.b16 %v762
    %v898 = vunpack.c.l.b16 %v763
    %v899 = vunpack.c.l.b16 %v764
    %v900 = vunpack.c.l.b16 %v765
    %v901 = vunpack.c.l.b16 %v766
    %v902 = vunpack.c.l.b16 %v767
    %v903 = vunpack.c.l.b16 %v768
    %v904 = vpack.c.b16 %v841, %v840
    %v905 = vpack.c.b16 %v843, %v842
    %v906 = vpack.c.b16 %v845, %v844
    %v907 = vpack.c.b16 %v847, %v846
    %v908 = vpack.c.b16 %v849, %v848
    %v909 = vpack.c.b16 %v851, %v850
    %v910 = vpack.c.b16 %v853, %v852
    %v911 = vpack.c.b16 %v855, %v854
    %v912 = vpack.c.b16 %v857, %v856
    %v913 = vpack.c.b16 %v859, %v858
    %v914 = vpack.c.b16 %v861, %v860
    %v915 = vpack.c.b16 %v863, %v862
    %v916 = vpack.c.b16 %v865, %v864
    %v917 = vpack.c.b16 %v867, %v866
    %v918 = vpack.c.b16 %v869, %v868
    %v919 = vpack.c.b16 %v871, %v870
    %v920 = vpack.c.b16 %v873, %v872
    %v921 = vpack.c.b16 %v875, %v874
    %v922 = vpack.c.b16 %v877, %v876
    %v923 = vpack.c.b16 %v879, %v878
    %v924 = vpack.c.b16 %v881, %v880
    %v925 = vpack.c.b16 %v883, %v882
    %v926 = vpack.c.b16 %v885, %v884
    %v927 = vpack.c.b16 %v887, %v886
    %v928 = vpack.c.b16 %v889, %v888
    %v929 = vpack.c.b16 %v891, %v890
    %v930 = vpack.c.b16 %v893, %v892
    %v931 = vpack.c.b16 %v895, %v894
    %v932 = vpack.c.b16 %v897, %v896
    %v933 = vpack.c.b16 %v899, %v898
    %v934 = vpack.c.b16 %v901, %v900
    %v935 = vpack.c.b16 %v903, %v902
    %968 = vmatprep.subr.bf16.mxu0 0
    %969 = vmatpush1.bf16.msra.mxu0 %v904
    %970 = vmatprep.subr.bf16.mxu0 0
    %971 = vmatpush1.bf16.msra.mxu0 %v905
    %972 = vmatprep.subr.bf16.mxu0 0
    %973 = vmatpush1.bf16.msra.mxu0 %v906
    %974 = vmatprep.subr.bf16.mxu0 0
    %975 = vmatpush1.bf16.msra.mxu0 %v907
    %976 = vmatprep.subr.bf16.mxu0 0
    %977 = vmatpush1.bf16.msra.mxu0 %v908
    %978 = vmatprep.subr.bf16.mxu0 0
    %979 = vmatpush1.bf16.msra.mxu0 %v909
    %980 = vmatprep.subr.bf16.mxu0 0
    %981 = vmatpush1.bf16.msra.mxu0 %v910
    %982 = vmatprep.subr.bf16.mxu0 0
    %983 = vmatpush1.bf16.msra.mxu0 %v911
    %984 = vmatprep.subr.bf16.mxu0 0
    %985 = vmatpush1.bf16.msra.mxu0 %v912
    %986 = vmatprep.subr.bf16.mxu0 0
    %987 = vmatpush1.bf16.msra.mxu0 %v913
    %988 = vmatprep.subr.bf16.mxu0 0
    %989 = vmatpush1.bf16.msra.mxu0 %v914
    %990 = vmatprep.subr.bf16.mxu0 0
    %991 = vmatpush1.bf16.msra.mxu0 %v915
    %992 = vmatprep.subr.bf16.mxu0 0
    %993 = vmatpush1.bf16.msra.mxu0 %v916
    %994 = vmatprep.subr.bf16.mxu0 0
    %995 = vmatpush1.bf16.msra.mxu0 %v917
    %996 = vmatprep.subr.bf16.mxu0 0
    %997 = vmatpush1.bf16.msra.mxu0 %v918
    %998 = vmatprep.subr.bf16.mxu0 0
    %999 = vmatpush1.bf16.msra.mxu0 %v919
    %1000 = vmatprep.mubr.bf16.mxu0 %v702
    %1001 = vmatmul.mubr.bf16.gmra.mrb[0].mxu0 %v701
    %v1002 = vpop.f32.mrb[0].mxu0
    %v1003 = vadd.f32 %v774, %v1002
    %v1004 = vpop.f32.mrb[0].mxu0
    %v1005 = vpop.f32.mrb[0].mxu0
    %v1006 = vadd.f32 %v774, %v1005
    %v1007 = vpop.f32.mrb[0].mxu0
    %1008 = vdwg.mxu0
    %1009 = vmatprep.subr.bf16.mxu0 0
    %1010 = vmatpush1.bf16.msra.mxu0 %v920
    %1011 = vmatprep.subr.bf16.mxu0 0
    %1012 = vmatpush1.bf16.msra.mxu0 %v921
    %1013 = vmatprep.subr.bf16.mxu0 0
    %1014 = vmatpush1.bf16.msra.mxu0 %v922
    %1015 = vmatprep.subr.bf16.mxu0 0
    %1016 = vmatpush1.bf16.msra.mxu0 %v923
    %1017 = vmatprep.subr.bf16.mxu0 0
    %1018 = vmatpush1.bf16.msra.mxu0 %v924
    %1019 = vmatprep.subr.bf16.mxu0 0
    %1020 = vmatpush1.bf16.msra.mxu0 %v925
    %1021 = vmatprep.subr.bf16.mxu0 0
    %1022 = vmatpush1.bf16.msra.mxu0 %v926
    %1023 = vmatprep.subr.bf16.mxu0 0
    %1024 = vmatpush1.bf16.msra.mxu0 %v927
    %1025 = vmatprep.subr.bf16.mxu0 0
    %1026 = vmatpush1.bf16.msra.mxu0 %v928
    %1027 = vmatprep.subr.bf16.mxu0 0
    %1028 = vmatpush1.bf16.msra.mxu0 %v929
    %1029 = vmatprep.subr.bf16.mxu0 0
    %1030 = vmatpush1.bf16.msra.mxu0 %v930
    %1031 = vmatprep.subr.bf16.mxu0 0
    %1032 = vmatpush1.bf16.msra.mxu0 %v931
    %1033 = vmatprep.subr.bf16.mxu0 0
    %1034 = vmatpush1.bf16.msra.mxu0 %v932
    %1035 = vmatprep.subr.bf16.mxu0 0
    %1036 = vmatpush1.bf16.msra.mxu0 %v933
    %1037 = vmatprep.subr.bf16.mxu0 0
    %1038 = vmatpush1.bf16.msra.mxu0 %v934
    %1039 = vmatprep.subr.bf16.mxu0 0
    %1040 = vmatpush1.bf16.msra.mxu0 %v935
    %1041 = vmatprep.mubr.bf16.mxu0 %v704
    %1042 = vmatmul.mubr.bf16.gmra.mrb[0].mxu0 %v703
    %v1043 = vpop.f32.mrb[0].mxu0
    %v1044 = vadd.f32 %v1003, %v1043
    %v1045 = vpop.f32.mrb[0].mxu0
    %v1046 = vpop.f32.mrb[0].mxu0
    %v1047 = vadd.f32 %v1006, %v1046
    %v1048 = vpop.f32.mrb[0].mxu0
    %1049 = vdwg.mxu0
    %v1050 = vmax.f32 %v1044, 0.0
    %v1051 = vmax.f32 %v1047, 0.0
    %v1052 = vpack.c.bf16 %v1051, %v1050
    %v1053 = vld [vmem:[#allocation10] sm:$0xf]
    %v1054 = vld [vmem:[#allocation10 + $0x4] sm:$0xf]
    %v1055 = vld [vmem:[#allocation10 + $0x8] sm:$0xf]
    %v1056 = vld [vmem:[#allocation10 + $0xc] sm:$0xf]
    %v1057 = vld [vmem:[#allocation10 + $0x10] sm:$0xf]
    %v1058 = vld [vmem:[#allocation10 + $0x14] sm:$0xf]
    %v1059 = vld [vmem:[#allocation10 + $0x18] sm:$0xf]
    %v1060 = vld [vmem:[#allocation10 + $0x1c] sm:$0xf]
    %v1061 = vld [vmem:[#allocation10 + $0x20] sm:$0xf]
    %v1062 = vld [vmem:[#allocation10 + $0x24] sm:$0xf]
    %v1063 = vld [vmem:[#allocation10 + $0x28] sm:$0xf]
    %v1064 = vld [vmem:[#allocation10 + $0x2c] sm:$0xf]
    %v1065 = vld [vmem:[#allocation10 + $0x30] sm:$0xf]
    %v1066 = vld [vmem:[#allocation10 + $0x34] sm:$0xf]
    %v1067 = vld [vmem:[#allocation10 + $0x38] sm:$0xf]
    %v1068 = vld [vmem:[#allocation10 + $0x3c] sm:$0xf]
    %v1069 = vld [vmem:[%s7] sm:$0x1]
    %v1071 = vlaneseq
    %v1072 = vshrl.u32 %v1071, 7
    %v1073 = vsub.s32 0, %v1072
    %v1074 = vrot.slane %v1069, %v1073
    %v1092 = vunpack.c.l.b16 %v1053
    %v1093 = vunpack.c.l.b16 %v1054
    %v1094 = vunpack.c.l.b16 %v1055
    %v1095 = vunpack.c.l.b16 %v1056
    %v1096 = vunpack.c.l.b16 %v1057
    %v1097 = vunpack.c.l.b16 %v1058
    %v1098 = vunpack.c.l.b16 %v1059
    %v1099 = vunpack.c.l.b16 %v1060
    %v1100 = vunpack.c.l.b16 %v1061
    %v1101 = vunpack.c.l.b16 %v1062
    %v1102 = vunpack.c.l.b16 %v1063
    %v1103 = vunpack.c.l.b16 %v1064
    %v1104 = vunpack.c.l.b16 %v1065
    %v1105 = vunpack.c.l.b16 %v1066
    %v1106 = vunpack.c.l.b16 %v1067
    %v1107 = vunpack.c.l.b16 %v1068
    %v1108 = vpack.c.b16 %v1093, %v1092
    %v1109 = vpack.c.b16 %v1095, %v1094
    %v1110 = vpack.c.b16 %v1097, %v1096
    %v1111 = vpack.c.b16 %v1099, %v1098
    %v1112 = vpack.c.b16 %v1101, %v1100
    %v1113 = vpack.c.b16 %v1103, %v1102
    %v1114 = vpack.c.b16 %v1105, %v1104
    %v1115 = vpack.c.b16 %v1107, %v1106
    %1124 = vmatprep.subr.bf16.mxu0 0
    %1125 = vmatpush1.bf16.msra.mxu0 %v1108
    %1126 = vmatprep.subr.bf16.mxu0 0
    %1127 = vmatpush1.bf16.msra.mxu0 %v1109
    %1128 = vmatprep.subr.bf16.mxu0 0
    %1129 = vmatpush1.bf16.msra.mxu0 %v1110
    %1130 = vmatprep.subr.bf16.mxu0 0
    %1131 = vmatpush1.bf16.msra.mxu0 %v1111
    %1132 = vmatprep.subr.bf16.mxu0 0
    %1133 = vmatpush1.bf16.msra.mxu0 %v1112
    %1134 = vmatprep.subr.bf16.mxu0 0
    %1135 = vmatpush1.bf16.msra.mxu0 %v1113
    %1136 = vmatprep.subr.bf16.mxu0 0
    %1137 = vmatpush1.bf16.msra.mxu0 %v1114
    %1138 = vmatprep.subr.bf16.mxu0 0
    %1139 = vmatpush1.bf16.msra.mxu0 %v1115
    %1140 = vmatprep.subr.bf16.mxu0 0
    %1141 = vmatpush1.bf16.msra.mxu0 0
    %1142 = vmatprep.subr.bf16.mxu0 0
    %1143 = vmatpush1.bf16.msra.mxu0 0
    %1144 = vmatprep.subr.bf16.mxu0 0
    %1145 = vmatpush1.bf16.msra.mxu0 0
    %1146 = vmatprep.subr.bf16.mxu0 0
    %1147 = vmatpush1.bf16.msra.mxu0 0
    %1148 = vmatprep.subr.bf16.mxu0 0
    %1149 = vmatpush1.bf16.msra.mxu0 0
    %1150 = vmatprep.subr.bf16.mxu0 0
    %1151 = vmatpush1.bf16.msra.mxu0 0
    %1152 = vmatprep.subr.bf16.mxu0 0
    %1153 = vmatpush1.bf16.msra.mxu0 0
    %1154 = vmatprep.subr.bf16.mxu0 0
    %1155 = vmatpush1.bf16.msra.mxu0 0
    %1156 = vmatprep.mubr.bf16.mxu0 0
    %1157 = vmatmul.mubr.bf16.gmra.mrb[0].mxu0 %v1052
    %v1158 = vpop.f32.mrb[0].mxu0
    %v1159 = vadd.f32 %v1074, %v1158
    %v1160 = vpop.f32.mrb[0].mxu0
    %v1161 = vpop.f32.mrb[0].mxu0
    %v1162 = vadd.f32 %v1074, %v1161
    %v1163 = vpop.f32.mrb[0].mxu0
    %1164 = vdwg.mxu0
    %1165 = vst [vmem:[#allocation11] sm:$0xff] %v1159
    %1166 = vst [vmem:[#allocation11 + $0x8] sm:$0xff] %v1162
    // Predicated region
    $region54: #{tpu_custom_call.1} parent=1 // pred_check
      _
    $region55: #{tpu_custom_call.1} parent=1 // pred_check_branch
      %1168 = sbr.rel (0) target = $region57
    $region56: #{tpu_custom_call.1} parent=1 // pred_region
      %s1170 = ssub.s32 256, 256
      %1171 = vsyncadd [#allocation4], %s1170
      %s1172 = sshll.u32 [#allocation11], 4
      %s1173 = int_to_ptr.vmem [resolvable:$true] %s1172
      %1178 = dma.vmem_to_hbm [thread:$0]  %s1173, 256, %s8, [#allocation4], 128, 128, 8
    $region57: #{tpu_custom_call.1} parent=1 // pred_fallthru
      _
    // Predicated region
    $region58: #{tpu_custom_call.1} parent=1 // pred_check
      _
    $region59: #{tpu_custom_call.1} parent=1 // pred_check_branch
      %1180 = sbr.rel (0) target = $region61
    $region60: #{tpu_custom_call.1} parent=1 // pred_region
      %1181 = dma.done [#allocation4], 256
    $region61: #{tpu_custom_call.1} parent=1 // pred_fallthru
      _
    %1182 = vsyncpa [#allocation3], 1
    %1183 = vsyncpa [#allocation6], 1
    %1184 = vsyncpa [#allocation9], 1
    %1185 = vsyncpa [#allocation4], 1

</llo_original>
